<compile_context>
chip_gen: v7x
topology: tpu7x:2x2x1
jax: 0.10.0
libtpu: 0.0.40
codegen_flags: <defaults>
</compile_context>

<pallas_src>
import jax
import jax.numpy as jnp
from jax.experimental import pallas as pl
from jax.experimental.pallas import tpu as pltpu


def _round_up(x, m):
    return ((x + m - 1) // m) * m


def _vmem_capacity_bytes():
    try:
        return int(pltpu.get_tpu_info().vmem_capacity_bytes)
    except Exception:
        return 64 * 1024 * 1024  # v7x physical VMEM; conservative default for v5e/v6e


def _select_tile_n(N, K, dmodel, in_bytes, out_bytes):
    """Largest row tile whose double-buffered in/out blocks fit a conservative VMEM budget.

    Budget is kept under the smallest scoped-VMEM default (v5e: 16 MiB) so no vmem_limit
    override is needed; for large N the tile is also capped at ~N/2 rows so the single
    'parallel' grid axis gives both v7x TensorCores work.
    """
    n8 = _round_up(max(N, 1), 8)
    budget = min(_vmem_capacity_bytes() // 4, 12 * 1024 * 1024)
    resident = K * dmodel * in_bytes + dmodel * 4            # single-buffered weight + bias
    per_row = 2 * (K * in_bytes + dmodel * out_bytes)        # double-buffered embed/out rows
    avail = max(budget - resident, 8 * per_row)
    tile = (avail // per_row) // 8 * 8
    tile = min(tile, 4096)                                   # diminishing returns beyond this
    tile = min(tile, n8)
    if n8 >= 16:                                             # >=2 grid steps (v7x megacore)
        tile = min(tile, _round_up(pl.cdiv(n8, 2), 8))
    return max(8, int(tile))


# -----------------------------------------------------------------------------
# Pallas kernel: spatialEmbedLinear  (nn.Linear(in_features=64, out_features=dmodel))
# -----------------------------------------------------------------------------
def _spatial_linear_kernel(e_ref, w_ref, b_ref, o_ref):
    # e_ref: (tile_n, K)  w_ref: (K, dmodel)  b_ref: (1, dmodel) f32  o_ref: (tile_n, dmodel)
    acc = jnp.dot(e_ref[...], w_ref[...], preferred_element_type=jnp.float32)
    # Bias add stays in f32 on the accumulator (no bf16 VPU dependence on v5e).
    o_ref[...] = (acc + b_ref[...]).astype(o_ref.dtype)


def _build_spatial_linear_call(N, K, dmodel, tile_n, in_dtype, out_dtype, *, single_buffer_params):
    in_bytes = jnp.dtype(in_dtype).itemsize
    out_bytes = jnp.dtype(out_dtype).itemsize
    resident_kw = {"pipeline_mode": pl.Buffered(1)} if single_buffer_params else {}

    cost = pl.CostEstimate(
        flops=2 * N * K * dmodel,
        transcendentals=0,
        bytes_accessed=N * K * in_bytes + K * dmodel * in_bytes + dmodel * 4
        + N * dmodel * out_bytes,
    )

    return pl.pallas_call(
        _spatial_linear_kernel,
        out_shape=jax.ShapeDtypeStruct((N, dmodel), out_dtype),
        grid=(pl.cdiv(N, tile_n),),
        in_specs=[
            pl.BlockSpec((tile_n, K), lambda i: (i, 0)),                    # streamed rows
            pl.BlockSpec((K, dmodel), lambda i: (0, 0), **resident_kw),     # resident weight
            pl.BlockSpec((1, dmodel), lambda i: (0, 0), **resident_kw),     # resident bias
        ],
        out_specs=pl.BlockSpec((tile_n, dmodel), lambda i: (i, 0)),
        compiler_params=pltpu.CompilerParams(dimension_semantics=("parallel",)),
        cost_estimate=cost,
    )


def spatial_embed_linear(embed, w, b2d, *, tile_n=None, out_dtype=jnp.float32):
    """embed: [N, K] (compute dtype), w: [K, dmodel] (compute dtype), b2d: [1, dmodel] f32.

    Operands are expected to be pre-cast once (see prepare_spatial_linear_params); nothing
    is padded or copied here.  Returns [N, dmodel] in `out_dtype`.
    """
    N, K = embed.shape
    Kw, dmodel = w.shape
    assert Kw == K and b2d.shape == (1, dmodel)

    in_bytes = jnp.dtype(embed.dtype).itemsize
    out_bytes = jnp.dtype(out_dtype).itemsize
    if tile_n is None:
        tile_n = _select_tile_n(N, K, dmodel, in_bytes, out_bytes)
    tile_n = max(8, _round_up(min(int(tile_n), _round_up(N, 8)), 8))

    try:
        call = _build_spatial_linear_call(
            N, K, dmodel, tile_n, embed.dtype, out_dtype, single_buffer_params=True
        )
        return call(embed, w, b2d)
    except Exception:
        # Fallback if pl.Buffered(1) on resident blocks is not supported by the installed JAX.
        call = _build_spatial_linear_call(
            N, K, dmodel, tile_n, embed.dtype, out_dtype, single_buffer_params=False
        )
        return call(embed, w, b2d)


# -----------------------------------------------------------------------------
# Parameter construction (deterministic, mirrors mixNet.__init__ shapes)
# -----------------------------------------------------------------------------
def prepare_spatial_linear_params(spatial_embed, w, b, compute_dtype=jnp.bfloat16):
    """One-time cast/reshape of the Linear operands (paid at init, not per forward call)."""
    return {
        "spatialEmbed_c": spatial_embed.astype(compute_dtype),
        "spatialEmbedLinear_w_c": w.astype(compute_dtype),
        "spatialEmbedLinear_b2d": b.astype(jnp.float32).reshape(1, -1),
    }


def init_mixnet_params(key, *, N, M, dmodel, spatial_feat=64, compute_dtype=jnp.bfloat16):
    k1, k2, k3, k4, k5 = jax.random.split(key, 5)
    params = {
        # nn.Parameter(torch.randn(N, M)) / (M, N)  -- consumed by GcnAtteNet
        "trainMatrix1": jax.random.normal(k1, (N, M), jnp.float32),
        "trainMatrix2": jax.random.normal(k2, (M, N), jnp.float32),
        # spatialEmbed is loaded from a file in the original code; synthetic [N, 64] here.
        "spatialEmbed": jax.random.normal(k3, (N, spatial_feat), jnp.float32),
        # nn.Linear(64, dmodel): torch weight [out, in] stored transposed as [in, out]
        "spatialEmbedLinear_w": jax.random.normal(k4, (spatial_feat, dmodel), jnp.float32)
        / jnp.sqrt(spatial_feat),
        "spatialEmbedLinear_b": jax.random.normal(k5, (dmodel,), jnp.float32) * 0.01,
    }
    params.update(
        prepare_spatial_linear_params(
            params["spatialEmbed"],
            params["spatialEmbedLinear_w"],
            params["spatialEmbedLinear_b"],
            compute_dtype=compute_dtype,
        )
    )
    return params


# -----------------------------------------------------------------------------
# Forward pass (semantics of mixNet.forward)
# -----------------------------------------------------------------------------
def mixnet_forward(params, X, Y, teacher_forcing_ratio=0.5):
    """
    X: [B, N, T, 2]   Y: [B, N, outputT, 2]
    Returns the tensors mixNet.forward hands to GcnAtteNet, with the spatial
    embedding projected by the Pallas linear kernel.
    """
    vx = X[..., 0]  # [B, N, T]
    tx = X[..., 1]  # [B, N, T]
    ty = Y[..., 1]  # [B, N, outputT]
    spatial = spatial_embed_linear(
        params["spatialEmbed_c"],
        params["spatialEmbedLinear_w_c"],
        params["spatialEmbedLinear_b2d"],
    )  # [N, dmodel] f32
    # TODO(synk): GcnAtteNet comes from external module `GG` whose source is not provided;
    # its forward cannot be reproduced, so we return its inputs instead.
    return vx, tx, ty, spatial


# -----------------------------------------------------------------------------
if __name__ == "__main__":
    # Small shapes consistent with the module's forward contract.
    B, N, T, outputT = 2, 8, 8, 4
    M, dmodel = 4, 32

    key = jax.random.PRNGKey(0)
    kp, kx, ky = jax.random.split(key, 3)

    params = init_mixnet_params(kp, N=N, M=M, dmodel=dmodel)
    X = jax.random.normal(kx, (B, N, T, 2), jnp.float32)
    Y = jax.random.normal(ky, (B, N, outputT, 2), jnp.float32)

    vx, tx, ty, spatial = mixnet_forward(params, X, Y, teacher_forcing_ratio=0.5)
    jax.block_until_ready((vx, tx, ty, spatial))

    # Correctness check against a plain-JAX reference using the same operand dtype.
    cd = params["spatialEmbed_c"].dtype
    ref = (
        jnp.dot(
            params["spatialEmbed"].astype(cd),
            params["spatialEmbedLinear_w"].astype(cd),
            preferred_element_type=jnp.float32,
        )
        + params["spatialEmbedLinear_b"][None, :]
    )
    tol = 1e-5 if cd == jnp.float32 else 1e-3
    assert spatial.shape == (N, dmodel)
    assert vx.shape == (B, N, T) and tx.shape == (B, N, T) and ty.shape == (B, N, outputT)
    assert jnp.allclose(spatial, ref.astype(spatial.dtype), atol=tol, rtol=tol), (
        "Pallas result mismatch"
    )

    print("KERNEL_OK")
</pallas_src>

<mosaic_0001>
module attributes {stable_mosaic.version = 11 : i64} {
  func.func @_spatial_linear_kernel(%arg0: i32, %arg1: memref<8x64xbf16, #tpu.memory_space<vmem>>, %arg2: memref<64x32xbf16, #tpu.memory_space<vmem>>, %arg3: memref<1x32xf32, #tpu.memory_space<vmem>>, %arg4: memref<8x32xf32, #tpu.memory_space<vmem>>) attributes {dimension_semantics = [#tpu.dimension_semantics<parallel>], iteration_bounds = array<i64: 1>, scalar_prefetch = 0 : i64, scratch_operands = 0 : i64, tpu.core_type = #tpu.core_type<tc>, window_params = [{transform_indices = @transform_0, window_bounds = array<i64: 8, 64>}, {pipeline_mode = #tpu.pipeline_mode<synchronous>, transform_indices = @transform_1, window_bounds = array<i64: 64, 32>}, {pipeline_mode = #tpu.pipeline_mode<synchronous>, transform_indices = @transform_2, window_bounds = array<i64: 1, 32>}, {transform_indices = @transform_3, window_bounds = array<i64: 8, 32>}]} {
    %c0 = arith.constant 0 : index
    %c0_0 = arith.constant 0 : index
    %0 = vector.load %arg1[%c0, %c0_0] : memref<8x64xbf16, #tpu.memory_space<vmem>>, vector<8x64xbf16>
    %c0_1 = arith.constant 0 : index
    %c0_2 = arith.constant 0 : index
    %1 = vector.load %arg2[%c0_1, %c0_2] : memref<64x32xbf16, #tpu.memory_space<vmem>>, vector<64x32xbf16>
    %cst = arith.constant dense<0.000000e+00> : vector<8x32xf32>
    %2 = tpu.matmul %0, %1, %cst {dimension_numbers = #tpu.dot_dimension_numbers<[1], [0], [0], [1], [0, 0, 1, 1], [], []>} : vector<8x64xbf16>, vector<64x32xbf16>, vector<8x32xf32> -> vector<8x32xf32>
    %c0_3 = arith.constant 0 : index
    %c0_4 = arith.constant 0 : index
    %3 = vector.load %arg3[%c0_3, %c0_4] : memref<1x32xf32, #tpu.memory_space<vmem>>, vector<1x32xf32>
    %4 = vector.broadcast %3 : vector<1x32xf32> to vector<8x32xf32>
    %5 = arith.addf %2, %4 : vector<8x32xf32>
    %c0_5 = arith.constant 0 : index
    %c0_6 = arith.constant 0 : index
    %6 = vector.load %arg4[%c0_5, %c0_6] : memref<8x32xf32, #tpu.memory_space<vmem>>, vector<8x32xf32>
    tpu.vector_store %arg4[%c0_5, %c0_6], %5 {strides = array<i32>} : memref<8x32xf32, #tpu.memory_space<vmem>>, vector<8x32xf32>,
    return
  }
  func.func @transform_0(%arg0: i32) -> (i32, i32) {
    %c0_i32 = arith.constant 0 : i32
    %c0_i32_0 = arith.constant 0 : i32
    return %arg0, %c0_i32 : i32, i32
  }
  func.func @transform_1(%arg0: i32) -> (i32, i32) {
    %c0_i32 = arith.constant 0 : i32
    %c0_i32_0 = arith.constant 0 : i32
    %c0_i32_1 = arith.constant 0 : i32
    return %c0_i32, %c0_i32_0 : i32, i32
  }
  func.func @transform_2(%arg0: i32) -> (i32, i32) {
    %c0_i32 = arith.constant 0 : i32
    %c0_i32_0 = arith.constant 0 : i32
    %c0_i32_1 = arith.constant 0 : i32
    return %c0_i32, %c0_i32_0 : i32, i32
  }
  func.func @transform_3(%arg0: i32) -> (i32, i32) {
    %c0_i32 = arith.constant 0 : i32
    %c0_i32_0 = arith.constant 0 : i32
    return %arg0, %c0_i32 : i32, i32
  }
}

module attributes {stable_mosaic.version = 11 : i64} {
  func.func @_spatial_linear_kernel(%arg0: i32, %arg1: memref<8x64xbf16, #tpu.memory_space<vmem>>, %arg2: memref<64x32xbf16, #tpu.memory_space<vmem>>, %arg3: memref<1x32xf32, #tpu.memory_space<vmem>>, %arg4: memref<8x32xf32, #tpu.memory_space<vmem>>) attributes {dimension_semantics = [#tpu.dimension_semantics<parallel>], iteration_bounds = array<i64: 1>, scalar_prefetch = 0 : i64, scratch_operands = 0 : i64, tpu.core_type = #tpu.core_type<tc>, window_params = [{transform_indices = @transform_0, window_bounds = array<i64: 8, 64>}, {pipeline_mode = #tpu.pipeline_mode<synchronous>, transform_indices = @transform_1, window_bounds = array<i64: 64, 32>}, {pipeline_mode = #tpu.pipeline_mode<synchronous>, transform_indices = @transform_2, window_bounds = array<i64: 1, 32>}, {transform_indices = @transform_3, window_bounds = array<i64: 8, 32>}]} {
    %c0 = arith.constant 0 : index
    %c0_0 = arith.constant 0 : index
    %0 = vector.load %arg1[%c0, %c0_0] : memref<8x64xbf16, #tpu.memory_space<vmem>>, vector<8x64xbf16>
    %c0_1 = arith.constant 0 : index
    %c0_2 = arith.constant 0 : index
    %1 = vector.load %arg2[%c0_1, %c0_2] : memref<64x32xbf16, #tpu.memory_space<vmem>>, vector<64x32xbf16>
    %cst = arith.constant dense<0.000000e+00> : vector<8x32xf32>
    %2 = tpu.matmul %0, %1, %cst {dimension_numbers = #tpu.dot_dimension_numbers<[1], [0], [0], [1], [0, 0, 1, 1], [], []>} : vector<8x64xbf16>, vector<64x32xbf16>, vector<8x32xf32> -> vector<8x32xf32>
    %c0_3 = arith.constant 0 : index
    %c0_4 = arith.constant 0 : index
    %3 = vector.load %arg3[%c0_3, %c0_4] : memref<1x32xf32, #tpu.memory_space<vmem>>, vector<1x32xf32>
    %4 = vector.broadcast %3 : vector<1x32xf32> to vector<8x32xf32>
    %5 = arith.addf %2, %4 : vector<8x32xf32>
    %c0_5 = arith.constant 0 : index
    %c0_6 = arith.constant 0 : index
    %6 = vector.load %arg4[%c0_5, %c0_6] : memref<8x32xf32, #tpu.memory_space<vmem>>, vector<8x32xf32>
    tpu.vector_store %arg4[%c0_5, %c0_6], %5 {strides = array<i32>} : memref<8x32xf32, #tpu.memory_space<vmem>>, vector<8x32xf32>,
    return
  }
  func.func @transform_0(%arg0: i32) -> (i32, i32) {
    %c0_i32 = arith.constant 0 : i32
    %c0_i32_0 = arith.constant 0 : i32
    return %arg0, %c0_i32 : i32, i32
  }
  func.func @transform_1(%arg0: i32) -> (i32, i32) {
    %c0_i32 = arith.constant 0 : i32
    %c0_i32_0 = arith.constant 0 : i32
    %c0_i32_1 = arith.constant 0 : i32
    return %c0_i32, %c0_i32_0 : i32, i32
  }
  func.func @transform_2(%arg0: i32) -> (i32, i32) {
    %c0_i32 = arith.constant 0 : i32
    %c0_i32_0 = arith.constant 0 : i32
    %c0_i32_1 = arith.constant 0 : i32
    return %c0_i32, %c0_i32_0 : i32, i32
  }
  func.func @transform_3(%arg0: i32) -> (i32, i32) {
    %c0_i32 = arith.constant 0 : i32
    %c0_i32_0 = arith.constant 0 : i32
    return %arg0, %c0_i32 : i32, i32
  }
}

</mosaic_0001>

<llo_original>
// kernel: tpu_custom_call.1
$region0: #{tpu_custom_call.1}
  #allocation0 [shape = 'u32[]', space=smem, size = 0x4, offset = 0x4, fixed_abs, tag = 'smem constant byte address 0x4 - core index']
  #allocation1 [shape = 'u32[144,128]{1,0:T(1,128)}', space=vmem, size = 0x12000, scoped, tag = 'internal scratch']
  %s0 = inlined_call_operand.vmem [shape: bf16[8,64], index: 0, kind: input, shape index: {}]
  %s1 = inlined_call_operand.vmem [shape: bf16[64,32], index: 1, kind: input, shape index: {}]
  %s2 = inlined_call_operand.vmem [shape: f32[1,32], index: 2, kind: input, shape index: {}]
  %s3 = inlined_call_operand.hbm [shape: f32[8,32], index: 3, kind: output, shape index: {}]
  %s4 = sld [smem:[#allocation0]]
  $region22: #{tpu_custom_call.1} parent=0
    _
  %s6 = ssub.s32 1, %s4
  %s7 = scalar_select 0, %s6, %s4
  $region1: #{tpu_custom_call.1} parent=0
    #allocation2 [shape = 'u8[4096]{0}', space=vmem, size = 0x1000, scoped, tag = 'output window, operand 0, single buffered']
    #allocation3 [shape = 's32[1]{0}', space=sflag, size = 0x4, scoped, tag = 'scoped memory for tpu_custom_call.1']
    %8 = vsyncpa [#allocation3], 0
    // Predicated region
    $region2: #{tpu_custom_call.1} parent=1 // pred_check
      _
    $region3: #{tpu_custom_call.1} parent=1 // pred_check_branch
      %10 = sbr.rel (0) target = $region5
    $region4: #{tpu_custom_call.1} parent=1 // pred_region
      _
    $region5: #{tpu_custom_call.1} parent=1 // pred_fallthru
      _
    // Predicated region
    $region6: #{tpu_custom_call.1} parent=1 // pred_check
      _
    $region7: #{tpu_custom_call.1} parent=1 // pred_check_branch
      %12 = sbr.rel (0) target = $region9
    $region8: #{tpu_custom_call.1} parent=1 // pred_region
      _
    $region9: #{tpu_custom_call.1} parent=1 // pred_fallthru
      _
    // Predicated region
    $region10: #{tpu_custom_call.1} parent=1 // pred_check
      _
    $region11: #{tpu_custom_call.1} parent=1 // pred_check_branch
      %14 = sbr.rel (0) target = $region13
    $region12: #{tpu_custom_call.1} parent=1 // pred_region
      _
    $region13: #{tpu_custom_call.1} parent=1 // pred_fallthru
      _
    %v16 = vld [vmem:[%s0] sm:$0xf]
    %v17 = vld [vmem:[%s1] sm:$0xf]
    %v18 = vld [vmem:[%s1 + $0x4] sm:$0xf]
    %v19 = vld [vmem:[%s1 + $0x8] sm:$0xf]
    %v20 = vld [vmem:[%s1 + $0xc] sm:$0xf]
    %v21 = vld [vmem:[%s1 + $0x10] sm:$0xf]
    %v22 = vld [vmem:[%s1 + $0x14] sm:$0xf]
    %v23 = vld [vmem:[%s1 + $0x18] sm:$0xf]
    %v24 = vld [vmem:[%s1 + $0x1c] sm:$0xf]
    %v25 = vld [vmem:[%s2] sm:$0x1]
    %v27 = vlaneseq
    %v28 = vshrl.u32 %v27, 7
    %v29 = vsub.s32 0, %v28
    %v30 = vrot.slane %v25, %v29
    %v40 = vunpack.c.l.b16 %v17
    %v41 = vunpack.c.l.b16 %v18
    %v42 = vunpack.c.l.b16 %v19
    %v43 = vunpack.c.l.b16 %v20
    %v44 = vunpack.c.l.b16 %v21
    %v45 = vunpack.c.l.b16 %v22
    %v46 = vunpack.c.l.b16 %v23
    %v47 = vunpack.c.l.b16 %v24
    %v48 = vpack.c.b16 %v41, %v40
    %v49 = vpack.c.b16 %v43, %v42
    %v50 = vpack.c.b16 %v45, %v44
    %v51 = vpack.c.b16 %v47, %v46
    %vm56 = vcmask 523264
    %v58 = vsel %vm56, %v16, 0
    %60 = vmatprep.subr.bf16.mxu0 0
    %61 = vmatpush1.bf16.msra.mxu0 %v48
    %62 = vmatprep.subr.bf16.mxu0 0
    %63 = vmatpush1.bf16.msra.mxu0 %v49
    %64 = vmatprep.subr.bf16.mxu0 0
    %65 = vmatpush1.bf16.msra.mxu0 %v50
    %66 = vmatprep.subr.bf16.mxu0 0
    %67 = vmatpush1.bf16.msra.mxu0 %v51
    %68 = vmatprep.subr.bf16.mxu0 0
    %69 = vmatpush1.bf16.msra.mxu0 0
    %70 = vmatprep.subr.bf16.mxu0 0
    %71 = vmatpush1.bf16.msra.mxu0 0
    %72 = vmatprep.subr.bf16.mxu0 0
    %73 = vmatpush1.bf16.msra.mxu0 0
    %74 = vmatprep.subr.bf16.mxu0 0
    %75 = vmatpush1.bf16.msra.mxu0 0
    %76 = vmatprep.subr.bf16.mxu0 0
    %77 = vmatpush1.bf16.msra.mxu0 0
    %78 = vmatprep.subr.bf16.mxu0 0
    %79 = vmatpush1.bf16.msra.mxu0 0
    %80 = vmatprep.subr.bf16.mxu0 0
    %81 = vmatpush1.bf16.msra.mxu0 0
    %82 = vmatprep.subr.bf16.mxu0 0
    %83 = vmatpush1.bf16.msra.mxu0 0
    %84 = vmatprep.subr.bf16.mxu0 0
    %85 = vmatpush1.bf16.msra.mxu0 0
    %86 = vmatprep.subr.bf16.mxu0 0
    %87 = vmatpush1.bf16.msra.mxu0 0
    %88 = vmatprep.subr.bf16.mxu0 0
    %89 = vmatpush1.bf16.msra.mxu0 0
    %90 = vmatprep.subr.bf16.mxu0 0
    %91 = vmatpush1.bf16.msra.mxu0 0
    %92 = vmatprep.mubr.bf16.mxu0 0
    %93 = vmatmul.mubr.bf16.gmra.mrb[0].mxu0 %v58
    %v94 = vpop.f32.mrb[0].mxu0
    %v95 = vadd.f32 %v30, %v94
    %v96 = vpop.f32.mrb[0].mxu0
    %v97 = vpop.f32.mrb[0].mxu0
    %v98 = vpop.f32.mrb[0].mxu0
    %99 = vdwg.mxu0
    %vm100 = vcmask 261120
    %101 = vst.msk [vmem:[#allocation2] sm:$0xff] %vm100, %v95
    // Predicated region
    $region14: #{tpu_custom_call.1} parent=1 // pred_check
      _
    $region15: #{tpu_custom_call.1} parent=1 // pred_check_branch
      %103 = sbr.rel (0) target = $region17
    $region16: #{tpu_custom_call.1} parent=1 // pred_region
      %s105 = ssub.s32 128, 128
      %106 = vsyncadd [#allocation3], %s105
      %s108 = sshll.u32 [#allocation2], 4
      %s109 = int_to_ptr.vmem [resolvable:$true] %s108
      %111 = dma.vmem_to_hbm [thread:$0]  %s109, 128, %s3, [#allocation3]
    $region17: #{tpu_custom_call.1} parent=1 // pred_fallthru
      _
    // Predicated region
    $region18: #{tpu_custom_call.1} parent=1 // pred_check
      _
    $region19: #{tpu_custom_call.1} parent=1 // pred_check_branch
      %113 = sbr.rel (0) target = $region21
    $region20: #{tpu_custom_call.1} parent=1 // pred_region
      %114 = dma.done [#allocation3], 128
    $region21: #{tpu_custom_call.1} parent=1 // pred_fallthru
      _
    %115 = vsyncpa [#allocation3], 1

// kernel: tpu_custom_call.1
$region0: #{tpu_custom_call.1}
  #allocation0 [shape = 'u32[]', space=smem, size = 0x4, offset = 0x4, fixed_abs, tag = 'smem constant byte address 0x4 - core index']
  #allocation1 [shape = 'u32[144,128]{1,0:T(1,128)}', space=vmem, size = 0x12000, scoped, tag = 'internal scratch']
  %s0 = inlined_call_operand.vmem [shape: bf16[8,64], index: 0, kind: input, shape index: {}]
  %s1 = inlined_call_operand.vmem [shape: bf16[64,32], index: 1, kind: input, shape index: {}]
  %s2 = inlined_call_operand.vmem [shape: f32[1,32], index: 2, kind: input, shape index: {}]
  %s3 = inlined_call_operand.hbm [shape: f32[8,32], index: 3, kind: output, shape index: {}]
  %s4 = sld [smem:[#allocation0]]
  $region22: #{tpu_custom_call.1} parent=0
    _
  %s6 = ssub.s32 1, %s4
  %s7 = scalar_select 0, %s6, %s4
  $region1: #{tpu_custom_call.1} parent=0
    #allocation2 [shape = 'u8[4096]{0}', space=vmem, size = 0x1000, scoped, tag = 'output window, operand 0, single buffered']
    #allocation3 [shape = 's32[1]{0}', space=sflag, size = 0x4, scoped, tag = 'scoped memory for tpu_custom_call.1']
    %8 = vsyncpa [#allocation3], 0
    // Predicated region
    $region2: #{tpu_custom_call.1} parent=1 // pred_check
      _
    $region3: #{tpu_custom_call.1} parent=1 // pred_check_branch
      %10 = sbr.rel (0) target = $region5
    $region4: #{tpu_custom_call.1} parent=1 // pred_region
      _
    $region5: #{tpu_custom_call.1} parent=1 // pred_fallthru
      _
    // Predicated region
    $region6: #{tpu_custom_call.1} parent=1 // pred_check
      _
    $region7: #{tpu_custom_call.1} parent=1 // pred_check_branch
      %12 = sbr.rel (0) target = $region9
    $region8: #{tpu_custom_call.1} parent=1 // pred_region
      _
    $region9: #{tpu_custom_call.1} parent=1 // pred_fallthru
      _
    // Predicated region
    $region10: #{tpu_custom_call.1} parent=1 // pred_check
      _
    $region11: #{tpu_custom_call.1} parent=1 // pred_check_branch
      %14 = sbr.rel (0) target = $region13
    $region12: #{tpu_custom_call.1} parent=1 // pred_region
      _
    $region13: #{tpu_custom_call.1} parent=1 // pred_fallthru
      _
    %v16 = vld [vmem:[%s0] sm:$0xf]
    %v17 = vld [vmem:[%s1] sm:$0xf]
    %v18 = vld [vmem:[%s1 + $0x4] sm:$0xf]
    %v19 = vld [vmem:[%s1 + $0x8] sm:$0xf]
    %v20 = vld [vmem:[%s1 + $0xc] sm:$0xf]
    %v21 = vld [vmem:[%s1 + $0x10] sm:$0xf]
    %v22 = vld [vmem:[%s1 + $0x14] sm:$0xf]
    %v23 = vld [vmem:[%s1 + $0x18] sm:$0xf]
    %v24 = vld [vmem:[%s1 + $0x1c] sm:$0xf]
    %v25 = vld [vmem:[%s2] sm:$0x1]
    %v27 = vlaneseq
    %v28 = vshrl.u32 %v27, 7
    %v29 = vsub.s32 0, %v28
    %v30 = vrot.slane %v25, %v29
    %v40 = vunpack.c.l.b16 %v17
    %v41 = vunpack.c.l.b16 %v18
    %v42 = vunpack.c.l.b16 %v19
    %v43 = vunpack.c.l.b16 %v20
    %v44 = vunpack.c.l.b16 %v21
    %v45 = vunpack.c.l.b16 %v22
    %v46 = vunpack.c.l.b16 %v23
    %v47 = vunpack.c.l.b16 %v24
    %v48 = vpack.c.b16 %v41, %v40
    %v49 = vpack.c.b16 %v43, %v42
    %v50 = vpack.c.b16 %v45, %v44
    %v51 = vpack.c.b16 %v47, %v46
    %vm56 = vcmask 523264
    %v58 = vsel %vm56, %v16, 0
    %60 = vmatprep.subr.bf16.mxu0 0
    %61 = vmatpush1.bf16.msra.mxu0 %v48
    %62 = vmatprep.subr.bf16.mxu0 0
    %63 = vmatpush1.bf16.msra.mxu0 %v49
    %64 = vmatprep.subr.bf16.mxu0 0
    %65 = vmatpush1.bf16.msra.mxu0 %v50
    %66 = vmatprep.subr.bf16.mxu0 0
    %67 = vmatpush1.bf16.msra.mxu0 %v51
    %68 = vmatprep.subr.bf16.mxu0 0
    %69 = vmatpush1.bf16.msra.mxu0 0
    %70 = vmatprep.subr.bf16.mxu0 0
    %71 = vmatpush1.bf16.msra.mxu0 0
    %72 = vmatprep.subr.bf16.mxu0 0
    %73 = vmatpush1.bf16.msra.mxu0 0
    %74 = vmatprep.subr.bf16.mxu0 0
    %75 = vmatpush1.bf16.msra.mxu0 0
    %76 = vmatprep.subr.bf16.mxu0 0
    %77 = vmatpush1.bf16.msra.mxu0 0
    %78 = vmatprep.subr.bf16.mxu0 0
    %79 = vmatpush1.bf16.msra.mxu0 0
    %80 = vmatprep.subr.bf16.mxu0 0
    %81 = vmatpush1.bf16.msra.mxu0 0
    %82 = vmatprep.subr.bf16.mxu0 0
    %83 = vmatpush1.bf16.msra.mxu0 0
    %84 = vmatprep.subr.bf16.mxu0 0
    %85 = vmatpush1.bf16.msra.mxu0 0
    %86 = vmatprep.subr.bf16.mxu0 0
    %87 = vmatpush1.bf16.msra.mxu0 0
    %88 = vmatprep.subr.bf16.mxu0 0
    %89 = vmatpush1.bf16.msra.mxu0 0
    %90 = vmatprep.subr.bf16.mxu0 0
    %91 = vmatpush1.bf16.msra.mxu0 0
    %92 = vmatprep.mubr.bf16.mxu0 0
    %93 = vmatmul.mubr.bf16.gmra.mrb[0].mxu0 %v58
    %v94 = vpop.f32.mrb[0].mxu0
    %v95 = vadd.f32 %v30, %v94
    %v96 = vpop.f32.mrb[0].mxu0
    %v97 = vpop.f32.mrb[0].mxu0
    %v98 = vpop.f32.mrb[0].mxu0
    %99 = vdwg.mxu0
    %vm100 = vcmask 261120
    %101 = vst.msk [vmem:[#allocation2] sm:$0xff] %vm100, %v95
    // Predicated region
    $region14: #{tpu_custom_call.1} parent=1 // pred_check
      _
    $region15: #{tpu_custom_call.1} parent=1 // pred_check_branch
      %103 = sbr.rel (0) target = $region17
    $region16: #{tpu_custom_call.1} parent=1 // pred_region
      %s105 = ssub.s32 128, 128
      %106 = vsyncadd [#allocation3], %s105
      %s108 = sshll.u32 [#allocation2], 4
      %s109 = int_to_ptr.vmem [resolvable:$true] %s108
      %111 = dma.vmem_to_hbm [thread:$0]  %s109, 128, %s3, [#allocation3]
    $region17: #{tpu_custom_call.1} parent=1 // pred_fallthru
      _
    // Predicated region
    $region18: #{tpu_custom_call.1} parent=1 // pred_check
      _
    $region19: #{tpu_custom_call.1} parent=1 // pred_check_branch
      %113 = sbr.rel (0) target = $region21
    $region20: #{tpu_custom_call.1} parent=1 // pred_region
      %114 = dma.done [#allocation3], 128
    $region21: #{tpu_custom_call.1} parent=1 // pred_fallthru
      _
    %115 = vsyncpa [#allocation3], 1

</llo_original>
